<compile_context>
chip_gen: v5e
topology: v5e:2x2
jax: 0.10.0
libtpu: 0.0.40
codegen_flags: <defaults>
</compile_context>

<pallas_src>
import functools

import jax
import jax.numpy as jnp
from jax.experimental import pallas as pl
from jax.experimental.pallas import tpu as pltpu


def _round_up(n, m):
    return ((n + m - 1) // m) * m


def qnet_kernel(x_ref, w1_ref, b1_ref, w2_ref, b2_ref, o_ref):
    # fc1: [TB, D_in](bf16) @ [D_in, 128](bf16) -> f32 accum; bias + ReLU in f32.
    h = jnp.dot(x_ref[...], w1_ref[...], preferred_element_type=jnp.float32)
    h = jnp.maximum(h + b1_ref[...], 0.0)
    # fc2: [TB, 128](bf16) @ [128, 128](bf16) -> f32 accum; bias in f32.
    out = jnp.dot(h.astype(w2_ref.dtype), w2_ref[...],
                  preferred_element_type=jnp.float32)
    o_ref[...] = (out + b2_ref[...]).astype(o_ref.dtype)


@functools.partial(jax.jit, static_argnames=("block_b",))
def qnetwork_forward(x, w1, b1, w2, b2, *, block_b=512):
    """relu(x @ w1 + b1) @ w2 + b2.  Weights are [in, out], biases [1, out]."""
    B, d_in = x.shape
    hidden = w1.shape[1]
    out_dim = w2.shape[1]

    # Lane-dense padding of the hidden and output feature dims (zeros -> exact).
    hid_p = _round_up(hidden, 128)
    out_p = _round_up(out_dim, 128)

    # Batch tile: 512 (multiple of 256 for v6e/v7x MXU) when B is large,
    # otherwise just B rounded up to the 8-sublane granule.
    tb = min(block_b, _round_up(B, 8))
    b_pad = _round_up(B, tb)

    x_p = jnp.zeros((b_pad, d_in), jnp.bfloat16).at[:B, :].set(x.astype(jnp.bfloat16))
    w1_p = jnp.zeros((d_in, hid_p), jnp.bfloat16).at[:, :hidden].set(w1.astype(jnp.bfloat16))
    b1_p = jnp.zeros((1, hid_p), jnp.float32).at[:, :hidden].set(b1.astype(jnp.float32))
    w2_p = jnp.zeros((hid_p, out_p), jnp.bfloat16).at[:hidden, :out_dim].set(w2.astype(jnp.bfloat16))
    b2_p = jnp.zeros((1, out_p), jnp.float32).at[:, :out_dim].set(b2.astype(jnp.float32))

    resident = lambda shape: pl.BlockSpec(shape, lambda i: (0, 0))

    out_padded = pl.pallas_call(
        qnet_kernel,
        out_shape=jax.ShapeDtypeStruct((b_pad, out_p), jnp.float32),
        grid=(b_pad // tb,),
        in_specs=[
            pl.BlockSpec((tb, d_in), lambda i: (i, 0)),   # streamed x tiles
            resident((d_in, hid_p)),                      # w1 (VMEM-resident)
            resident((1, hid_p)),                         # b1
            resident((hid_p, out_p)),                     # w2
            resident((1, out_p)),                         # b2
        ],
        out_specs=pl.BlockSpec((tb, out_p), lambda i: (i, 0)),
        compiler_params=pltpu.CompilerParams(
            dimension_semantics=("parallel",)),
    )(x_p, w1_p, b1_p, w2_p, b2_p)

    return out_padded[:B, :out_dim]


def init_linear_params(key, in_features, out_features):
    """Deterministic init mimicking nn.Linear default (uniform ±1/sqrt(fan_in))."""
    kw, kb = jax.random.split(key)
    bound = 1.0 / jnp.sqrt(jnp.float32(in_features))
    w = jax.random.uniform(kw, (in_features, out_features), jnp.float32, -bound, bound)
    b = jax.random.uniform(kb, (1, out_features), jnp.float32, -bound, bound)
    return w, b


if __name__ == "__main__":
    # Small shapes consistent with QNetwork(input_dim, output_dim).
    batch = 8
    input_dim = 32
    hidden = 64
    output_dim = 8

    key = jax.random.PRNGKey(0)
    kx, k1, k2 = jax.random.split(key, 3)

    x = jax.random.normal(kx, (batch, input_dim), jnp.float32)
    w1, b1 = init_linear_params(k1, input_dim, hidden)
    w2, b2 = init_linear_params(k2, hidden, output_dim)

    out = qnetwork_forward(x, w1, b1, w2, b2)
    out = jax.block_until_ready(out)
    assert out.shape == (batch, output_dim)

    # Reference in the same precision as the kernel (bf16 matmuls, f32 accum).
    xb, w1b, w2b = (a.astype(jnp.bfloat16) for a in (x, w1, w2))
    h_ref = jnp.maximum(jnp.dot(xb, w1b, preferred_element_type=jnp.float32) + b1, 0.0)
    ref_bf16 = jnp.dot(h_ref.astype(jnp.bfloat16), w2b,
                       preferred_element_type=jnp.float32) + b2
    assert jnp.allclose(out, ref_bf16, atol=1e-2, rtol=1e-2)

    # Loose check against a pure-f32 reference (bf16 quantization error only).
    ref_f32 = jnp.maximum(x @ w1 + b1, 0.0) @ w2 + b2
    assert jnp.allclose(out, ref_f32, atol=5e-2, rtol=5e-2)

    # Exercise the tiled / multi-grid-step path with a larger batch.
    big_b = 2048
    x_big = jax.random.normal(jax.random.PRNGKey(1), (big_b, input_dim), jnp.float32)
    out_big = jax.block_until_ready(qnetwork_forward(x_big, w1, b1, w2, b2))
    assert out_big.shape == (big_b, output_dim)
    ref_big = jnp.maximum(x_big @ w1 + b1, 0.0) @ w2 + b2
    assert jnp.allclose(out_big, ref_big, atol=5e-2, rtol=5e-2)

    print("KERNEL_OK")
</pallas_src>

<mosaic_0001>
module attributes {stable_mosaic.version = 11 : i64} {
  func.func @qnet_kernel(%arg0: i32, %arg1: memref<8x32xbf16, #tpu.memory_space<vmem>>, %arg2: memref<32x128xbf16, #tpu.memory_space<vmem>>, %arg3: memref<1x128xf32, #tpu.memory_space<vmem>>, %arg4: memref<128x128xbf16, #tpu.memory_space<vmem>>, %arg5: memref<1x128xf32, #tpu.memory_space<vmem>>, %arg6: memref<8x128xf32, #tpu.memory_space<vmem>>) attributes {dimension_semantics = [#tpu.dimension_semantics<parallel>], iteration_bounds = array<i64: 1>, scalar_prefetch = 0 : i64, scratch_operands = 0 : i64, tpu.core_type = #tpu.core_type<tc>, window_params = [{transform_indices = @transform_0, window_bounds = array<i64: 8, 32>}, {pipeline_mode = #tpu.pipeline_mode<synchronous>, transform_indices = @transform_1, window_bounds = array<i64: 32, 128>}, {pipeline_mode = #tpu.pipeline_mode<synchronous>, transform_indices = @transform_2, window_bounds = array<i64: 1, 128>}, {pipeline_mode = #tpu.pipeline_mode<synchronous>, transform_indices = @transform_3, window_bounds = array<i64: 128, 128>}, {pipeline_mode = #tpu.pipeline_mode<synchronous>, transform_indices = @transform_4, window_bounds = array<i64: 1, 128>}, {transform_indices = @transform_5, window_bounds = array<i64: 8, 128>}]} {
    %c0 = arith.constant 0 : index
    %c0_0 = arith.constant 0 : index
    %0 = vector.load %arg1[%c0, %c0_0] : memref<8x32xbf16, #tpu.memory_space<vmem>>, vector<8x32xbf16>
    %c0_1 = arith.constant 0 : index
    %c0_2 = arith.constant 0 : index
    %1 = vector.load %arg2[%c0_1, %c0_2] : memref<32x128xbf16, #tpu.memory_space<vmem>>, vector<32x128xbf16>
    %cst = arith.constant dense<0.000000e+00> : vector<8x128xf32>
    %2 = tpu.matmul %0, %1, %cst {dimension_numbers = #tpu.dot_dimension_numbers<[1], [0], [0], [1], [0, 0, 1, 1], [], []>} : vector<8x32xbf16>, vector<32x128xbf16>, vector<8x128xf32> -> vector<8x128xf32>
    %c0_3 = arith.constant 0 : index
    %c0_4 = arith.constant 0 : index
    %3 = vector.load %arg3[%c0_3, %c0_4] : memref<1x128xf32, #tpu.memory_space<vmem>>, vector<1x128xf32>
    %4 = vector.broadcast %3 : vector<1x128xf32> to vector<8x128xf32>
    %5 = arith.addf %2, %4 : vector<8x128xf32>
    %cst_5 = arith.constant 0.000000e+00 : f32
    %6 = vector.broadcast %cst_5 : f32 to vector<8x128xf32>
    %7 = arith.maximumf %5, %6 : vector<8x128xf32>
    %8 = arith.truncf %7 : vector<8x128xf32> to vector<8x128xbf16>
    %c0_6 = arith.constant 0 : index
    %c0_7 = arith.constant 0 : index
    %9 = vector.load %arg4[%c0_6, %c0_7] : memref<128x128xbf16, #tpu.memory_space<vmem>>, vector<128x128xbf16>
    %cst_8 = arith.constant dense<0.000000e+00> : vector<8x128xf32>
    %10 = tpu.matmul %8, %9, %cst_8 {dimension_numbers = #tpu.dot_dimension_numbers<[1], [0], [0], [1], [0, 0, 1, 1], [], []>} : vector<8x128xbf16>, vector<128x128xbf16>, vector<8x128xf32> -> vector<8x128xf32>
    %c0_9 = arith.constant 0 : index
    %c0_10 = arith.constant 0 : index
    %11 = vector.load %arg5[%c0_9, %c0_10] : memref<1x128xf32, #tpu.memory_space<vmem>>, vector<1x128xf32>
    %12 = vector.broadcast %11 : vector<1x128xf32> to vector<8x128xf32>
    %13 = arith.addf %10, %12 : vector<8x128xf32>
    %c0_11 = arith.constant 0 : index
    %c0_12 = arith.constant 0 : index
    %14 = vector.load %arg6[%c0_11, %c0_12] : memref<8x128xf32, #tpu.memory_space<vmem>>, vector<8x128xf32>
    tpu.vector_store %arg6[%c0_11, %c0_12], %13 {strides = array<i32>} : memref<8x128xf32, #tpu.memory_space<vmem>>, vector<8x128xf32>,
    return
  }
  func.func @transform_0(%arg0: i32) -> (i32, i32) {
    %c0_i32 = arith.constant 0 : i32
    %c0_i32_0 = arith.constant 0 : i32
    return %arg0, %c0_i32 : i32, i32
  }
  func.func @transform_1(%arg0: i32) -> (i32, i32) {
    %c0_i32 = arith.constant 0 : i32
    %c0_i32_0 = arith.constant 0 : i32
    %c0_i32_1 = arith.constant 0 : i32
    return %c0_i32, %c0_i32_0 : i32, i32
  }
  func.func @transform_2(%arg0: i32) -> (i32, i32) {
    %c0_i32 = arith.constant 0 : i32
    %c0_i32_0 = arith.constant 0 : i32
    %c0_i32_1 = arith.constant 0 : i32
    return %c0_i32, %c0_i32_0 : i32, i32
  }
  func.func @transform_3(%arg0: i32) -> (i32, i32) {
    %c0_i32 = arith.constant 0 : i32
    %c0_i32_0 = arith.constant 0 : i32
    %c0_i32_1 = arith.constant 0 : i32
    return %c0_i32, %c0_i32_0 : i32, i32
  }
  func.func @transform_4(%arg0: i32) -> (i32, i32) {
    %c0_i32 = arith.constant 0 : i32
    %c0_i32_0 = arith.constant 0 : i32
    %c0_i32_1 = arith.constant 0 : i32
    return %c0_i32, %c0_i32_0 : i32, i32
  }
  func.func @transform_5(%arg0: i32) -> (i32, i32) {
    %c0_i32 = arith.constant 0 : i32
    %c0_i32_0 = arith.constant 0 : i32
    return %arg0, %c0_i32 : i32, i32
  }
}

</mosaic_0001>

<llo_original>
// kernel: qnetwork_forward.1
$region0: #{qnetwork_forward.1}
  #allocation0 [shape = 'u32[]', space=smem, size = 0x4, offset = 0x4, fixed_abs, tag = 'smem constant byte address 0x4 - core index']
  #allocation1 [shape = 'u32[72,128]{1,0:T(1,128)}', space=vmem, size = 0x9000, scoped, tag = 'internal scratch']
  %s0 = inlined_call_operand.vmem [shape: bf16[8,32], index: 0, kind: input, shape index: {}]
  %s1 = inlined_call_operand.vmem [shape: bf16[32,128], index: 1, kind: input, shape index: {}]
  %s2 = inlined_call_operand.vmem [shape: f32[1,128], index: 2, kind: input, shape index: {}]
  %s3 = inlined_call_operand.vmem [shape: bf16[128,128], index: 3, kind: input, shape index: {}]
  %s4 = inlined_call_operand.vmem [shape: f32[1,128], index: 4, kind: input, shape index: {}]
  %s5 = inlined_call_operand.hbm [shape: f32[8,128], index: 5, kind: output, shape index: {}]
  %s6 = sld [smem:[#allocation0]]
  $region30: #{qnetwork_forward.1} parent=0
    _
  %s8 = ssub.s32 1, %s6
  %s9 = scalar_select 0, %s8, %s6
  $region1: #{qnetwork_forward.1} parent=0
    #allocation2 [shape = 'u8[4096]{0}', space=vmem, size = 0x1000, scoped, tag = 'output window, operand 0, single buffered']
    #allocation3 [shape = 's32[1]{0}', space=sflag, size = 0x4, scoped, tag = 'scoped memory for qnetwork_forward.1']
    %10 = vsyncpa [#allocation3], 0
    // Predicated region
    $region2: #{qnetwork_forward.1} parent=1 // pred_check
      _
    $region3: #{qnetwork_forward.1} parent=1 // pred_check_branch
      %12 = sbr.rel (0) target = $region5
    $region4: #{qnetwork_forward.1} parent=1 // pred_region
      _
    $region5: #{qnetwork_forward.1} parent=1 // pred_fallthru
      _
    // Predicated region
    $region6: #{qnetwork_forward.1} parent=1 // pred_check
      _
    $region7: #{qnetwork_forward.1} parent=1 // pred_check_branch
      %14 = sbr.rel (0) target = $region9
    $region8: #{qnetwork_forward.1} parent=1 // pred_region
      _
    $region9: #{qnetwork_forward.1} parent=1 // pred_fallthru
      _
    // Predicated region
    $region10: #{qnetwork_forward.1} parent=1 // pred_check
      _
    $region11: #{qnetwork_forward.1} parent=1 // pred_check_branch
      %16 = sbr.rel (0) target = $region13
    $region12: #{qnetwork_forward.1} parent=1 // pred_region
      _
    $region13: #{qnetwork_forward.1} parent=1 // pred_fallthru
      _
    // Predicated region
    $region14: #{qnetwork_forward.1} parent=1 // pred_check
      _
    $region15: #{qnetwork_forward.1} parent=1 // pred_check_branch
      %18 = sbr.rel (0) target = $region17
    $region16: #{qnetwork_forward.1} parent=1 // pred_region
      _
    $region17: #{qnetwork_forward.1} parent=1 // pred_fallthru
      _
    // Predicated region
    $region18: #{qnetwork_forward.1} parent=1 // pred_check
      _
    $region19: #{qnetwork_forward.1} parent=1 // pred_check_branch
      %20 = sbr.rel (0) target = $region21
    $region20: #{qnetwork_forward.1} parent=1 // pred_region
      _
    $region21: #{qnetwork_forward.1} parent=1 // pred_fallthru
      _
    %v22 = vld [vmem:[%s0] sm:$0xf]
    %v23 = vld [vmem:[%s1] sm:$0xf]
    %v24 = vld [vmem:[%s1 + $0x4] sm:$0xf]
    %v25 = vld [vmem:[%s1 + $0x8] sm:$0xf]
    %v26 = vld [vmem:[%s1 + $0xc] sm:$0xf]
    %v27 = vld [vmem:[%s2] sm:$0x1]
    %v29 = vperm.slane %v27, 0
    %v35 = vunpack.c.l.b16 %v23
    %v36 = vunpack.c.l.b16 %v24
    %v37 = vunpack.c.l.b16 %v25
    %v38 = vunpack.c.l.b16 %v26
    %v39 = vpack.c.b16 %v36, %v35
    %v40 = vpack.c.b16 %v38, %v37
    %vm43 = vcmask 261120
    %v45 = vsel %vm43, %v22, 0
    %47 = vmatpush.bf16.msra.mxu0 0
    %48 = vmatpush.bf16.msra.mxu0 0
    %49 = vmatpush.bf16.msra.mxu0 0
    %50 = vmatpush.bf16.msra.mxu0 0
    %51 = vmatpush.bf16.msra.mxu0 0
    %52 = vmatpush.bf16.msra.mxu0 0
    %53 = vmatpush.bf16.msra.mxu0 %v40
    %54 = vmatpush.bf16.msra.mxu0 %v39
    %55 = vmatmul.bf16.gmra.mxu0 %v45
    %v56 = vpop.f32.mrf.mxu0
    %v57 = vadd.f32 %v29, %v56
    %v58 = vpop.f32.mrf.mxu0
    %59 = vdwg.mxu0
    %v60 = vmax.f32 %v57, 0.0
    %v61 = vpack.c.bf16 %v60, %v60
    %v62 = vld [vmem:[%s3] sm:$0xf]
    %v63 = vld [vmem:[%s3 + $0x4] sm:$0xf]
    %v64 = vld [vmem:[%s3 + $0x8] sm:$0xf]
    %v65 = vld [vmem:[%s3 + $0xc] sm:$0xf]
    %v66 = vld [vmem:[%s3 + $0x10] sm:$0xf]
    %v67 = vld [vmem:[%s3 + $0x14] sm:$0xf]
    %v68 = vld [vmem:[%s3 + $0x18] sm:$0xf]
    %v69 = vld [vmem:[%s3 + $0x1c] sm:$0xf]
    %v70 = vld [vmem:[%s3 + $0x20] sm:$0xf]
    %v71 = vld [vmem:[%s3 + $0x24] sm:$0xf]
    %v72 = vld [vmem:[%s3 + $0x28] sm:$0xf]
    %v73 = vld [vmem:[%s3 + $0x2c] sm:$0xf]
    %v74 = vld [vmem:[%s3 + $0x30] sm:$0xf]
    %v75 = vld [vmem:[%s3 + $0x34] sm:$0xf]
    %v76 = vld [vmem:[%s3 + $0x38] sm:$0xf]
    %v77 = vld [vmem:[%s3 + $0x3c] sm:$0xf]
    %v78 = vld [vmem:[%s4] sm:$0x1]
    %v80 = vperm.slane %v78, 0
    %v98 = vunpack.c.l.b16 %v62
    %v99 = vunpack.c.l.b16 %v63
    %v100 = vunpack.c.l.b16 %v64
    %v101 = vunpack.c.l.b16 %v65
    %v102 = vunpack.c.l.b16 %v66
    %v103 = vunpack.c.l.b16 %v67
    %v104 = vunpack.c.l.b16 %v68
    %v105 = vunpack.c.l.b16 %v69
    %v106 = vunpack.c.l.b16 %v70
    %v107 = vunpack.c.l.b16 %v71
    %v108 = vunpack.c.l.b16 %v72
    %v109 = vunpack.c.l.b16 %v73
    %v110 = vunpack.c.l.b16 %v74
    %v111 = vunpack.c.l.b16 %v75
    %v112 = vunpack.c.l.b16 %v76
    %v113 = vunpack.c.l.b16 %v77
    %v114 = vpack.c.b16 %v99, %v98
    %v115 = vpack.c.b16 %v101, %v100
    %v116 = vpack.c.b16 %v103, %v102
    %v117 = vpack.c.b16 %v105, %v104
    %v118 = vpack.c.b16 %v107, %v106
    %v119 = vpack.c.b16 %v109, %v108
    %v120 = vpack.c.b16 %v111, %v110
    %v121 = vpack.c.b16 %v113, %v112
    %130 = vmatpush.bf16.msra.mxu0 %v121
    %131 = vmatpush.bf16.msra.mxu0 %v120
    %132 = vmatpush.bf16.msra.mxu0 %v119
    %133 = vmatpush.bf16.msra.mxu0 %v118
    %134 = vmatpush.bf16.msra.mxu0 %v117
    %135 = vmatpush.bf16.msra.mxu0 %v116
    %136 = vmatpush.bf16.msra.mxu0 %v115
    %137 = vmatpush.bf16.msra.mxu0 %v114
    %138 = vmatmul.bf16.gmra.mxu0 %v61
    %v139 = vpop.f32.mrf.mxu0
    %v140 = vadd.f32 %v80, %v139
    %v141 = vpop.f32.mrf.mxu0
    %142 = vdwg.mxu0
    %143 = vst [vmem:[#allocation2] sm:$0xff] %v140
    // Predicated region
    $region22: #{qnetwork_forward.1} parent=1 // pred_check
      _
    $region23: #{qnetwork_forward.1} parent=1 // pred_check_branch
      %145 = sbr.rel (0) target = $region25
    $region24: #{qnetwork_forward.1} parent=1 // pred_region
      %147 = vsyncadd [#allocation3], 0
      %s149 = sshll.u32 [#allocation2], 4
      %s150 = int_to_ptr.vmem [resolvable:$true] %s149
      %s151 = sshll.u32 %s5, 4
      %s152 = int_to_ptr.hbm [resolvable:$true] %s151
      %154 = dma.vmem_to_hbm [thread:$0]  %s150, 128, %s152, [#allocation3]
    $region25: #{qnetwork_forward.1} parent=1 // pred_fallthru
      _
    // Predicated region
    $region26: #{qnetwork_forward.1} parent=1 // pred_check
      _
    $region27: #{qnetwork_forward.1} parent=1 // pred_check_branch
      %156 = sbr.rel (0) target = $region29
    $region28: #{qnetwork_forward.1} parent=1 // pred_region
      %158 = dma.done [#allocation3], 128
    $region29: #{qnetwork_forward.1} parent=1 // pred_fallthru
      _
    %159 = vsyncpa [#allocation3], 1

</llo_original>
